<compile_context>
chip_gen: v7x
topology: tpu7x:2x2x1
jax: 0.10.0
libtpu: 0.0.40
codegen_flags: <defaults>
</compile_context>

<pallas_src>
from functools import partial

import numpy as np

import jax
import jax.numpy as jnp
from jax.experimental import pallas as pl
from jax.experimental.pallas import tpu as pltpu


def _lngap_kernel(x_ref, ss_ref, w_ref, b_ref, o_ref):
    # x_ref:  (Bt, C*L)   flattened input tile (lane-dense last dim)
    # ss_ref: (2,  C*L)   row 0 = folded BN scale, row 1 = folded BN shift
    # w_ref:  (C*L, Kpad) pool + flatten + dense combined weight (lane-dense)
    # b_ref:  (1,  Kpad)  dense bias (zero-padded to Kpad)
    # o_ref:  (Bt, Kpad)
    x = x_ref[...].astype(jnp.float32)
    scale = ss_ref[0:1, :]
    shift = ss_ref[1:2, :]
    y = jnp.maximum(x * scale + shift, 0.0)                    # BN + ReLU  (VPU)
    o = jnp.dot(y.astype(w_ref.dtype), w_ref[...],             # pool+dense (MXU)
                preferred_element_type=jnp.float32)
    o_ref[...] = (o + b_ref[...]).astype(o_ref.dtype)


def _adaptive_avg_pool1d_matrix(length, out_size):
    # Exact nn.AdaptiveAvgPool1d semantics: window i = [floor(i*L/o), ceil((i+1)*L/o))
    P = np.zeros((length, out_size), np.float32)
    for i in range(out_size):
        start = (i * length) // out_size
        end = ((i + 1) * length + out_size - 1) // out_size
        P[start:end, i] = 1.0 / (end - start)
    return P


def _select_batch_tile(b, footprint, budget):
    # Whole batch fits in VMEM: run a single grid step (the grid is a *serial*
    # loop on 1-TC chips; tiny per-step matmuls waste MXU rows and ~0.35us of
    # per-step overhead each).
    if footprint(b) <= budget:
        # 2-way split only when each half still fills >=128 MXU rows, so the
        # two v7x TensorCores (grid axis marked "parallel") both get real work.
        if b >= 256 and b % 2 == 0 and (b // 2) % 8 == 0:
            return b // 2
        return b
    # VMEM forces a split: largest >=128-row tile that divides B and fits.
    for bt in (2048, 1024, 512, 256, 128):
        if b % bt == 0 and footprint(bt) <= budget:
            return bt
    # Last resort: largest multiple-of-8 divisor of B that fits the budget.
    best = None
    for cand in range(8, b, 8):
        if b % cand == 0 and footprint(cand) <= budget:
            best = cand
    return best if best is not None else b


@partial(jax.jit,
         static_argnames=("pool_size", "eps", "batch_tile", "k_pad", "matmul_dtype"))
def lngap_forward(x, params, *, pool_size=7, eps=1e-5, batch_tile=None,
                  k_pad=None, matmul_dtype=jnp.bfloat16):
    b, c, L = x.shape
    n_classes = params["w_dense"].shape[0]
    cl = c * L

    # ---- trace-time constant folding (fused / constant-folded by jit) -------
    scale = params["gamma"] * jax.lax.rsqrt(params["running_var"] + eps)     # (C,)
    shift = params["beta"] - params["running_mean"] * scale                  # (C,)
    scale_shift = jnp.stack(
        [jnp.repeat(scale, L), jnp.repeat(shift, L)]).astype(jnp.float32)    # (2, C*L)

    P = jnp.asarray(_adaptive_avg_pool1d_matrix(L, pool_size))               # (L, 7)
    # w_dense is (K, 7*C); pooled-flatten order of (B, C, 7) is c*7 + i.
    w_r = params["w_dense"].T.reshape(c, pool_size, n_classes)               # (C, 7, K)
    w_comb = jnp.einsum("li,cik->clk", P, w_r).reshape(cl, n_classes)        # (C*L, K)

    # Lane-dense output: pad K up to a multiple of 128 so stores are unmasked
    # full-lane vst and the MXU result columns are a whole tile.
    if k_pad is None:
        k_pad = 128 * ((n_classes + 127) // 128)
    w_comb = jnp.pad(w_comb, ((0, 0), (0, k_pad - n_classes))).astype(matmul_dtype)
    b_pad = jnp.pad(params["b_dense"], (0, k_pad - n_classes))
    b_pad = b_pad.reshape(1, k_pad).astype(jnp.float32)

    x_flat = x.reshape(b, cl)     # free row-major reshape; lane dim = C*L

    # ---- VMEM-aware batch-tile selection -------------------------------------
    x_bytes = jnp.dtype(x.dtype).itemsize
    w_bytes = jnp.dtype(matmul_dtype).itemsize
    o_bytes = jnp.dtype(x.dtype).itemsize

    def footprint(bt):                        # BlockSpec double-buffers each operand
        return (2 * bt * cl * x_bytes         # x tile
                + 2 * 2 * cl * 4              # packed scale/shift
                + 2 * cl * k_pad * w_bytes    # combined weight
                + 2 * k_pad * 4               # bias
                + 2 * bt * k_pad * o_bytes)   # output tile

    vmem_budget = 40 * 1024 * 1024            # stays under v7x's 64 MiB physical VMEM
    if batch_tile is None:
        batch_tile = _select_batch_tile(b, footprint, vmem_budget)
    grid = (pl.cdiv(b, batch_tile),)

    vmem_limit = int(min(48 * 1024 * 1024,
                         max(32 * 1024 * 1024, 2 * footprint(batch_tile))))

    out = pl.pallas_call(
        _lngap_kernel,
        out_shape=jax.ShapeDtypeStruct((b, k_pad), x.dtype),
        grid_spec=pltpu.PrefetchScalarGridSpec(
            num_scalar_prefetch=0,
            grid=grid,
            in_specs=[
                pl.BlockSpec((batch_tile, cl), lambda i: (i, 0)),
                pl.BlockSpec((2, cl), lambda i: (0, 0)),
                pl.BlockSpec((cl, k_pad), lambda i: (0, 0)),
                pl.BlockSpec((1, k_pad), lambda i: (0, 0)),
            ],
            out_specs=pl.BlockSpec((batch_tile, k_pad), lambda i: (i, 0)),
        ),
        compiler_params=pltpu.CompilerParams(
            dimension_semantics=("parallel",),
            vmem_limit_bytes=vmem_limit,
        ),
    )(x_flat, scale_shift, w_comb, b_pad)
    return out[:, :n_classes]


def lngap_reference(x, params, *, pool_size=7, eps=1e-5):
    # Pure-JAX reference matching the PyTorch (eval-mode) semantics.
    b, c, L = x.shape
    mean = params["running_mean"][None, :, None]
    var = params["running_var"][None, :, None]
    gamma = params["gamma"][None, :, None]
    beta = params["beta"][None, :, None]
    y = (x - mean) / jnp.sqrt(var + eps) * gamma + beta
    y = jnp.maximum(y, 0.0)
    P = jnp.asarray(_adaptive_avg_pool1d_matrix(L, pool_size))
    pooled = jnp.einsum("bcl,li->bci", y, P)                   # AdaptiveAvgPool1d(7)
    flat = pooled.reshape(b, c * pool_size)                    # x.view(B, -1)
    return flat @ params["w_dense"].T + params["b_dense"]      # Linear


if __name__ == "__main__":
    # Small shapes consistent with the module: batch=16, in_features=16,
    # seq length L=56 (C*L = 896 = 7*128 -> lane-dense input blocks), 10 classes.
    b, c, L = 16, 16, 56
    n_classes = 10

    key = jax.random.PRNGKey(0)
    k_x, k_g, k_b, k_m, k_v, k_w, k_bd = jax.random.split(key, 7)

    x = jax.random.normal(k_x, (b, c, L), dtype=jnp.float32)
    params = {
        "gamma": 1.0 + 0.1 * jax.random.normal(k_g, (c,), jnp.float32),
        "beta": 0.1 * jax.random.normal(k_b, (c,), jnp.float32),
        "running_mean": 0.1 * jax.random.normal(k_m, (c,), jnp.float32),
        "running_var": 1.0 + 0.1 * jax.random.uniform(k_v, (c,), jnp.float32),
        "w_dense": jax.random.normal(k_w, (n_classes, 7 * c), jnp.float32)
                   * ((7 * c) ** -0.5),
        "b_dense": 0.01 * jax.random.normal(k_bd, (n_classes,), jnp.float32),
    }

    out_ref = lngap_reference(x, params)

    # Full-f32 matmul path: tight tolerance.
    out_f32 = lngap_forward(x, params, matmul_dtype=jnp.float32)
    jax.block_until_ready(out_f32)
    np.testing.assert_allclose(np.asarray(out_f32), np.asarray(out_ref),
                               rtol=1e-4, atol=1e-4)

    # Default bf16-operand / f32-accumulate path: looser tolerance.
    out_bf16 = lngap_forward(x, params)
    jax.block_until_ready(out_bf16)
    np.testing.assert_allclose(np.asarray(out_bf16), np.asarray(out_ref),
                               rtol=3e-2, atol=3e-2)

    assert out_f32.shape == (b, n_classes)
    assert out_bf16.shape == (b, n_classes)
    print("KERNEL_OK")
</pallas_src>

<mosaic_0001>
module attributes {stable_mosaic.version = 11 : i64} {
  func.func @_lngap_kernel(%arg0: i32, %arg1: memref<16x896xf32, #tpu.memory_space<vmem>>, %arg2: memref<2x896xf32, #tpu.memory_space<vmem>>, %arg3: memref<896x128xf32, #tpu.memory_space<vmem>>, %arg4: memref<1x128xf32, #tpu.memory_space<vmem>>, %arg5: memref<16x128xf32, #tpu.memory_space<vmem>>) attributes {dimension_semantics = [#tpu.dimension_semantics<parallel>], iteration_bounds = array<i64: 1>, scalar_prefetch = 0 : i64, scratch_operands = 0 : i64, tpu.core_type = #tpu.core_type<tc>, window_params = [{transform_indices = @transform_0, window_bounds = array<i64: 16, 896>}, {pipeline_mode = #tpu.pipeline_mode<synchronous>, transform_indices = @transform_1, window_bounds = array<i64: 2, 896>}, {pipeline_mode = #tpu.pipeline_mode<synchronous>, transform_indices = @transform_2, window_bounds = array<i64: 896, 128>}, {pipeline_mode = #tpu.pipeline_mode<synchronous>, transform_indices = @transform_3, window_bounds = array<i64: 1, 128>}, {transform_indices = @transform_4, window_bounds = array<i64: 16, 128>}]} {
    %c0 = arith.constant 0 : index
    %c0_0 = arith.constant 0 : index
    %0 = vector.load %arg1[%c0, %c0_0] : memref<16x896xf32, #tpu.memory_space<vmem>>, vector<16x896xf32>
    %c0_1 = arith.constant 0 : index
    %c0_2 = arith.constant 0 : index
    %1 = vector.load %arg2[%c0_1, %c0_2] : memref<2x896xf32, #tpu.memory_space<vmem>>, vector<1x896xf32>
    %c1 = arith.constant 1 : index
    %c0_3 = arith.constant 0 : index
    %2 = vector.load %arg2[%c1, %c0_3] : memref<2x896xf32, #tpu.memory_space<vmem>>, vector<1x896xf32>
    %3 = vector.broadcast %1 : vector<1x896xf32> to vector<16x896xf32>
    %4 = arith.mulf %0, %3 : vector<16x896xf32>
    %5 = vector.broadcast %2 : vector<1x896xf32> to vector<16x896xf32>
    %6 = arith.addf %4, %5 : vector<16x896xf32>
    %cst = arith.constant 0.000000e+00 : f32
    %7 = vector.broadcast %cst : f32 to vector<16x896xf32>
    %8 = arith.maximumf %6, %7 : vector<16x896xf32>
    %c0_4 = arith.constant 0 : index
    %c0_5 = arith.constant 0 : index
    %9 = vector.load %arg3[%c0_4, %c0_5] : memref<896x128xf32, #tpu.memory_space<vmem>>, vector<896x128xf32>
    %cst_6 = arith.constant dense<0.000000e+00> : vector<16x128xf32>
    %10 = tpu.matmul %8, %9, %cst_6 {dimension_numbers = #tpu.dot_dimension_numbers<[1], [0], [0], [1], [0, 0, 1, 1], [], []>} : vector<16x896xf32>, vector<896x128xf32>, vector<16x128xf32> -> vector<16x128xf32>
    %c0_7 = arith.constant 0 : index
    %c0_8 = arith.constant 0 : index
    %11 = vector.load %arg4[%c0_7, %c0_8] : memref<1x128xf32, #tpu.memory_space<vmem>>, vector<1x128xf32>
    %12 = vector.broadcast %11 : vector<1x128xf32> to vector<16x128xf32>
    %13 = arith.addf %10, %12 : vector<16x128xf32>
    %c0_9 = arith.constant 0 : index
    %c0_10 = arith.constant 0 : index
    %14 = vector.load %arg5[%c0_9, %c0_10] : memref<16x128xf32, #tpu.memory_space<vmem>>, vector<16x128xf32>
    tpu.vector_store %arg5[%c0_9, %c0_10], %13 {strides = array<i32>} : memref<16x128xf32, #tpu.memory_space<vmem>>, vector<16x128xf32>,
    return
  }
  func.func @transform_0(%arg0: i32) -> (i32, i32) {
    %c0_i32 = arith.constant 0 : i32
    %c0_i32_0 = arith.constant 0 : i32
    return %arg0, %c0_i32 : i32, i32
  }
  func.func @transform_1(%arg0: i32) -> (i32, i32) {
    %c0_i32 = arith.constant 0 : i32
    %c0_i32_0 = arith.constant 0 : i32
    %c0_i32_1 = arith.constant 0 : i32
    return %c0_i32, %c0_i32_0 : i32, i32
  }
  func.func @transform_2(%arg0: i32) -> (i32, i32) {
    %c0_i32 = arith.constant 0 : i32
    %c0_i32_0 = arith.constant 0 : i32
    %c0_i32_1 = arith.constant 0 : i32
    return %c0_i32, %c0_i32_0 : i32, i32
  }
  func.func @transform_3(%arg0: i32) -> (i32, i32) {
    %c0_i32 = arith.constant 0 : i32
    %c0_i32_0 = arith.constant 0 : i32
    %c0_i32_1 = arith.constant 0 : i32
    return %c0_i32, %c0_i32_0 : i32, i32
  }
  func.func @transform_4(%arg0: i32) -> (i32, i32) {
    %c0_i32 = arith.constant 0 : i32
    %c0_i32_0 = arith.constant 0 : i32
    return %arg0, %c0_i32 : i32, i32
  }
}

</mosaic_0001>

<llo_original>
// kernel: lngap_forward.1
$region0: #{lngap_forward.1}
  #allocation0 [shape = 'u32[]', space=smem, size = 0x4, offset = 0x4, fixed_abs, tag = 'smem constant byte address 0x4 - core index']
  #allocation1 [shape = 'u32[144,128]{1,0:T(1,128)}', space=vmem, size = 0x12000, scoped, tag = 'internal scratch']
  %s0 = inlined_call_operand.vmem [shape: f32[16,896], index: 0, kind: input, shape index: {}]
  %s1 = inlined_call_operand.vmem [shape: f32[2,896], index: 1, kind: input, shape index: {}]
  %s2 = inlined_call_operand.vmem [shape: f32[896,128], index: 2, kind: input, shape index: {}]
  %s3 = inlined_call_operand.vmem [shape: f32[1,128], index: 3, kind: input, shape index: {}]
  %s4 = inlined_call_operand.hbm [shape: f32[16,128], index: 4, kind: output, shape index: {}]
  %s5 = sld [smem:[#allocation0]]
  $region26: #{lngap_forward.1} parent=0
    _
  %s7 = ssub.s32 1, %s5
  %s8 = scalar_select 0, %s7, %s5
  $region1: #{lngap_forward.1} parent=0
    #allocation2 [shape = 'u8[8192]{0}', space=vmem, size = 0x2000, scoped, tag = 'output window, operand 0, single buffered']
    #allocation3 [shape = 's32[1]{0}', space=sflag, size = 0x4, scoped, tag = 'scoped memory for lngap_forward.1']
    %9 = vsyncpa [#allocation3], 0
    // Predicated region
    $region2: #{lngap_forward.1} parent=1 // pred_check
      _
    $region3: #{lngap_forward.1} parent=1 // pred_check_branch
      %11 = sbr.rel (0) target = $region5
    $region4: #{lngap_forward.1} parent=1 // pred_region
      _
    $region5: #{lngap_forward.1} parent=1 // pred_fallthru
      _
    // Predicated region
    $region6: #{lngap_forward.1} parent=1 // pred_check
      _
    $region7: #{lngap_forward.1} parent=1 // pred_check_branch
      %13 = sbr.rel (0) target = $region9
    $region8: #{lngap_forward.1} parent=1 // pred_region
      _
    $region9: #{lngap_forward.1} parent=1 // pred_fallthru
      _
    // Predicated region
    $region10: #{lngap_forward.1} parent=1 // pred_check
      _
    $region11: #{lngap_forward.1} parent=1 // pred_check_branch
      %15 = sbr.rel (0) target = $region13
    $region12: #{lngap_forward.1} parent=1 // pred_region
      _
    $region13: #{lngap_forward.1} parent=1 // pred_fallthru
      _
    // Predicated region
    $region14: #{lngap_forward.1} parent=1 // pred_check
      _
    $region15: #{lngap_forward.1} parent=1 // pred_check_branch
      %17 = sbr.rel (0) target = $region17
    $region16: #{lngap_forward.1} parent=1 // pred_region
      _
    $region17: #{lngap_forward.1} parent=1 // pred_fallthru
      _
    %v18 = vld [vmem:[%s0] sm:$0xff]
    %v19 = vld [vmem:[%s0 + $0x8] sm:$0xff]
    %v20 = vld [vmem:[%s0 + $0x10] sm:$0xff]
    %v21 = vld [vmem:[%s0 + $0x18] sm:$0xff]
    %v22 = vld [vmem:[%s0 + $0x20] sm:$0xff]
    %v23 = vld [vmem:[%s0 + $0x28] sm:$0xff]
    %v24 = vld [vmem:[%s0 + $0x30] sm:$0xff]
    %v25 = vld [vmem:[%s0 + $0x38] sm:$0xff]
    %v26 = vld [vmem:[%s0 + $0x40] sm:$0xff]
    %v27 = vld [vmem:[%s0 + $0x48] sm:$0xff]
    %v28 = vld [vmem:[%s0 + $0x50] sm:$0xff]
    %v29 = vld [vmem:[%s0 + $0x58] sm:$0xff]
    %v30 = vld [vmem:[%s0 + $0x60] sm:$0xff]
    %v31 = vld [vmem:[%s0 + $0x68] sm:$0xff]
    %v32 = vld [vmem:[%s1] ss:$2 sm:$0xff]
    %s33 = scalar_lea.vmem %s1, 1
    %v34 = vld [vmem:[%s33] ss:$2 sm:$0xff]
    %v36 = vlaneseq
    %v37 = vshrl.u32 %v36, 7
    %v38 = vsub.s32 0, %v37
    %v39 = vrot.slane %v32, %v38
    %v40 = vlaneseq
    %v41 = vshrl.u32 %v40, 7
    %v42 = vsub.s32 1, %v41
    %v43 = vrot.slane %v32, %v42
    %v44 = vlaneseq
    %v45 = vshrl.u32 %v44, 7
    %v46 = vsub.s32 2, %v45
    %v47 = vrot.slane %v32, %v46
    %v48 = vlaneseq
    %v49 = vshrl.u32 %v48, 7
    %v50 = vsub.s32 3, %v49
    %v51 = vrot.slane %v32, %v50
    %v52 = vlaneseq
    %v53 = vshrl.u32 %v52, 7
    %v54 = vsub.s32 4, %v53
    %v55 = vrot.slane %v32, %v54
    %v56 = vlaneseq
    %v57 = vshrl.u32 %v56, 7
    %v58 = vsub.s32 5, %v57
    %v59 = vrot.slane %v32, %v58
    %v60 = vlaneseq
    %v61 = vshrl.u32 %v60, 7
    %v62 = vsub.s32 6, %v61
    %v63 = vrot.slane %v32, %v62
    %v71 = vmul.f32 %v18, %v39
    %v72 = vmul.f32 %v19, %v43
    %v73 = vmul.f32 %v20, %v47
    %v74 = vmul.f32 %v21, %v51
    %v75 = vmul.f32 %v22, %v55
    %v76 = vmul.f32 %v23, %v59
    %v77 = vmul.f32 %v24, %v63
    %v78 = vmul.f32 %v25, %v39
    %v79 = vmul.f32 %v26, %v43
    %v80 = vmul.f32 %v27, %v47
    %v81 = vmul.f32 %v28, %v51
    %v82 = vmul.f32 %v29, %v55
    %v83 = vmul.f32 %v30, %v59
    %v84 = vmul.f32 %v31, %v63
    %v86 = vlaneseq
    %v87 = vshrl.u32 %v86, 7
    %v88 = vsub.s32 0, %v87
    %v89 = vrot.slane %v34, %v88
    %v90 = vlaneseq
    %v91 = vshrl.u32 %v90, 7
    %v92 = vsub.s32 1, %v91
    %v93 = vrot.slane %v34, %v92
    %v94 = vlaneseq
    %v95 = vshrl.u32 %v94, 7
    %v96 = vsub.s32 2, %v95
    %v97 = vrot.slane %v34, %v96
    %v98 = vlaneseq
    %v99 = vshrl.u32 %v98, 7
    %v100 = vsub.s32 3, %v99
    %v101 = vrot.slane %v34, %v100
    %v102 = vlaneseq
    %v103 = vshrl.u32 %v102, 7
    %v104 = vsub.s32 4, %v103
    %v105 = vrot.slane %v34, %v104
    %v106 = vlaneseq
    %v107 = vshrl.u32 %v106, 7
    %v108 = vsub.s32 5, %v107
    %v109 = vrot.slane %v34, %v108
    %v110 = vlaneseq
    %v111 = vshrl.u32 %v110, 7
    %v112 = vsub.s32 6, %v111
    %v113 = vrot.slane %v34, %v112
    %v121 = vadd.f32 %v71, %v89
    %v122 = vadd.f32 %v72, %v93
    %v123 = vadd.f32 %v73, %v97
    %v124 = vadd.f32 %v74, %v101
    %v125 = vadd.f32 %v75, %v105
    %v126 = vadd.f32 %v76, %v109
    %v127 = vadd.f32 %v77, %v113
    %v128 = vadd.f32 %v78, %v89
    %v129 = vadd.f32 %v79, %v93
    %v130 = vadd.f32 %v80, %v97
    %v131 = vadd.f32 %v81, %v101
    %v132 = vadd.f32 %v82, %v105
    %v133 = vadd.f32 %v83, %v109
    %v134 = vadd.f32 %v84, %v113
    %v135 = vmax.f32 %v121, 0.0
    %v136 = vmax.f32 %v122, 0.0
    %v137 = vmax.f32 %v123, 0.0
    %v138 = vmax.f32 %v124, 0.0
    %v139 = vmax.f32 %v125, 0.0
    %v140 = vmax.f32 %v126, 0.0
    %v141 = vmax.f32 %v127, 0.0
    %v142 = vmax.f32 %v128, 0.0
    %v143 = vmax.f32 %v129, 0.0
    %v144 = vmax.f32 %v130, 0.0
    %v145 = vmax.f32 %v131, 0.0
    %v146 = vmax.f32 %v132, 0.0
    %v147 = vmax.f32 %v133, 0.0
    %v148 = vmax.f32 %v134, 0.0
    %v149 = vld [vmem:[%s2] sm:$0xff]
    %v150 = vld [vmem:[%s2 + $0x8] sm:$0xff]
    %v151 = vld [vmem:[%s2 + $0x10] sm:$0xff]
    %v152 = vld [vmem:[%s2 + $0x18] sm:$0xff]
    %v153 = vld [vmem:[%s2 + $0x20] sm:$0xff]
    %v154 = vld [vmem:[%s2 + $0x28] sm:$0xff]
    %v155 = vld [vmem:[%s2 + $0x30] sm:$0xff]
    %v156 = vld [vmem:[%s2 + $0x38] sm:$0xff]
    %v157 = vld [vmem:[%s2 + $0x40] sm:$0xff]
    %v158 = vld [vmem:[%s2 + $0x48] sm:$0xff]
    %v159 = vld [vmem:[%s2 + $0x50] sm:$0xff]
    %v160 = vld [vmem:[%s2 + $0x58] sm:$0xff]
    %v161 = vld [vmem:[%s2 + $0x60] sm:$0xff]
    %v162 = vld [vmem:[%s2 + $0x68] sm:$0xff]
    %v163 = vld [vmem:[%s2 + $0x70] sm:$0xff]
    %v164 = vld [vmem:[%s2 + $0x78] sm:$0xff]
    %v165 = vld [vmem:[%s2 + $0x80] sm:$0xff]
    %v166 = vld [vmem:[%s2 + $0x88] sm:$0xff]
    %v167 = vld [vmem:[%s2 + $0x90] sm:$0xff]
    %v168 = vld [vmem:[%s2 + $0x98] sm:$0xff]
    %v169 = vld [vmem:[%s2 + $0xa0] sm:$0xff]
    %v170 = vld [vmem:[%s2 + $0xa8] sm:$0xff]
    %v171 = vld [vmem:[%s2 + $0xb0] sm:$0xff]
    %v172 = vld [vmem:[%s2 + $0xb8] sm:$0xff]
    %v173 = vld [vmem:[%s2 + $0xc0] sm:$0xff]
    %v174 = vld [vmem:[%s2 + $0xc8] sm:$0xff]
    %v175 = vld [vmem:[%s2 + $0xd0] sm:$0xff]
    %v176 = vld [vmem:[%s2 + $0xd8] sm:$0xff]
    %v177 = vld [vmem:[%s2 + $0xe0] sm:$0xff]
    %v178 = vld [vmem:[%s2 + $0xe8] sm:$0xff]
    %v179 = vld [vmem:[%s2 + $0xf0] sm:$0xff]
    %v180 = vld [vmem:[%s2 + $0xf8] sm:$0xff]
    %v181 = vld [vmem:[%s2 + $0x100] sm:$0xff]
    %v182 = vld [vmem:[%s2 + $0x108] sm:$0xff]
    %v183 = vld [vmem:[%s2 + $0x110] sm:$0xff]
    %v184 = vld [vmem:[%s2 + $0x118] sm:$0xff]
    %v185 = vld [vmem:[%s2 + $0x120] sm:$0xff]
    %v186 = vld [vmem:[%s2 + $0x128] sm:$0xff]
    %v187 = vld [vmem:[%s2 + $0x130] sm:$0xff]
    %v188 = vld [vmem:[%s2 + $0x138] sm:$0xff]
    %v189 = vld [vmem:[%s2 + $0x140] sm:$0xff]
    %v190 = vld [vmem:[%s2 + $0x148] sm:$0xff]
    %v191 = vld [vmem:[%s2 + $0x150] sm:$0xff]
    %v192 = vld [vmem:[%s2 + $0x158] sm:$0xff]
    %v193 = vld [vmem:[%s2 + $0x160] sm:$0xff]
    %v194 = vld [vmem:[%s2 + $0x168] sm:$0xff]
    %v195 = vld [vmem:[%s2 + $0x170] sm:$0xff]
    %v196 = vld [vmem:[%s2 + $0x178] sm:$0xff]
    %v197 = vld [vmem:[%s2 + $0x180] sm:$0xff]
    %v198 = vld [vmem:[%s2 + $0x188] sm:$0xff]
    %v199 = vld [vmem:[%s2 + $0x190] sm:$0xff]
    %v200 = vld [vmem:[%s2 + $0x198] sm:$0xff]
    %v201 = vld [vmem:[%s2 + $0x1a0] sm:$0xff]
    %v202 = vld [vmem:[%s2 + $0x1a8] sm:$0xff]
    %v203 = vld [vmem:[%s2 + $0x1b0] sm:$0xff]
    %v204 = vld [vmem:[%s2 + $0x1b8] sm:$0xff]
    %v205 = vld [vmem:[%s2 + $0x1c0] sm:$0xff]
    %v206 = vld [vmem:[%s2 + $0x1c8] sm:$0xff]
    %v207 = vld [vmem:[%s2 + $0x1d0] sm:$0xff]
    %v208 = vld [vmem:[%s2 + $0x1d8] sm:$0xff]
    %v209 = vld [vmem:[%s2 + $0x1e0] sm:$0xff]
    %v210 = vld [vmem:[%s2 + $0x1e8] sm:$0xff]
    %v211 = vld [vmem:[%s2 + $0x1f0] sm:$0xff]
    %v212 = vld [vmem:[%s2 + $0x1f8] sm:$0xff]
    %v213 = vld [vmem:[%s2 + $0x200] sm:$0xff]
    %v214 = vld [vmem:[%s2 + $0x208] sm:$0xff]
    %v215 = vld [vmem:[%s2 + $0x210] sm:$0xff]
    %v216 = vld [vmem:[%s2 + $0x218] sm:$0xff]
    %v217 = vld [vmem:[%s2 + $0x220] sm:$0xff]
    %v218 = vld [vmem:[%s2 + $0x228] sm:$0xff]
    %v219 = vld [vmem:[%s2 + $0x230] sm:$0xff]
    %v220 = vld [vmem:[%s2 + $0x238] sm:$0xff]
    %v221 = vld [vmem:[%s2 + $0x240] sm:$0xff]
    %v222 = vld [vmem:[%s2 + $0x248] sm:$0xff]
    %v223 = vld [vmem:[%s2 + $0x250] sm:$0xff]
    %v224 = vld [vmem:[%s2 + $0x258] sm:$0xff]
    %v225 = vld [vmem:[%s2 + $0x260] sm:$0xff]
    %v226 = vld [vmem:[%s2 + $0x268] sm:$0xff]
    %v227 = vld [vmem:[%s2 + $0x270] sm:$0xff]
    %v228 = vld [vmem:[%s2 + $0x278] sm:$0xff]
    %v229 = vld [vmem:[%s2 + $0x280] sm:$0xff]
    %v230 = vld [vmem:[%s2 + $0x288] sm:$0xff]
    %v231 = vld [vmem:[%s2 + $0x290] sm:$0xff]
    %v232 = vld [vmem:[%s2 + $0x298] sm:$0xff]
    %v233 = vld [vmem:[%s2 + $0x2a0] sm:$0xff]
    %v234 = vld [vmem:[%s2 + $0x2a8] sm:$0xff]
    %v235 = vld [vmem:[%s2 + $0x2b0] sm:$0xff]
    %v236 = vld [vmem:[%s2 + $0x2b8] sm:$0xff]
    %v237 = vld [vmem:[%s2 + $0x2c0] sm:$0xff]
    %v238 = vld [vmem:[%s2 + $0x2c8] sm:$0xff]
    %v239 = vld [vmem:[%s2 + $0x2d0] sm:$0xff]
    %v240 = vld [vmem:[%s2 + $0x2d8] sm:$0xff]
    %v241 = vld [vmem:[%s2 + $0x2e0] sm:$0xff]
    %v242 = vld [vmem:[%s2 + $0x2e8] sm:$0xff]
    %v243 = vld [vmem:[%s2 + $0x2f0] sm:$0xff]
    %v244 = vld [vmem:[%s2 + $0x2f8] sm:$0xff]
    %v245 = vld [vmem:[%s2 + $0x300] sm:$0xff]
    %v246 = vld [vmem:[%s2 + $0x308] sm:$0xff]
    %v247 = vld [vmem:[%s2 + $0x310] sm:$0xff]
    %v248 = vld [vmem:[%s2 + $0x318] sm:$0xff]
    %v249 = vld [vmem:[%s2 + $0x320] sm:$0xff]
    %v250 = vld [vmem:[%s2 + $0x328] sm:$0xff]
    %v251 = vld [vmem:[%s2 + $0x330] sm:$0xff]
    %v252 = vld [vmem:[%s2 + $0x338] sm:$0xff]
    %v253 = vld [vmem:[%s2 + $0x340] sm:$0xff]
    %v254 = vld [vmem:[%s2 + $0x348] sm:$0xff]
    %v255 = vld [vmem:[%s2 + $0x350] sm:$0xff]
    %v256 = vld [vmem:[%s2 + $0x358] sm:$0xff]
    %v257 = vld [vmem:[%s2 + $0x360] sm:$0xff]
    %v258 = vld [vmem:[%s2 + $0x368] sm:$0xff]
    %v259 = vld [vmem:[%s2 + $0x370] sm:$0xff]
    %v260 = vld [vmem:[%s2 + $0x378] sm:$0xff]
    %v261 = vld [vmem:[%s3] sm:$0x1]
    %v263 = vlaneseq
    %v264 = vshrl.u32 %v263, 7
    %v265 = vsub.s32 0, %v264
    %v266 = vrot.slane %v261, %v265
    %268 = vmatprep.subr.mxu0 0.0
    %269 = vmatpush1.msra.mxu0 %v149
    %270 = vmatprep.subr.mxu0 0.0
    %271 = vmatpush1.msra.mxu0 %v150
    %272 = vmatprep.subr.mxu0 0.0
    %273 = vmatpush1.msra.mxu0 %v151
    %274 = vmatprep.subr.mxu0 0.0
    %275 = vmatpush1.msra.mxu0 %v152
    %276 = vmatprep.subr.mxu0 0.0
    %277 = vmatpush1.msra.mxu0 %v153
    %278 = vmatprep.subr.mxu0 0.0
    %279 = vmatpush1.msra.mxu0 %v154
    %280 = vmatprep.subr.mxu0 0.0
    %281 = vmatpush1.msra.mxu0 %v155
    %282 = vmatprep.subr.mxu0 0.0
    %283 = vmatpush1.msra.mxu0 %v156
    %284 = vmatprep.subr.mxu0 0.0
    %285 = vmatpush1.msra.mxu0 %v157
    %286 = vmatprep.subr.mxu0 0.0
    %287 = vmatpush1.msra.mxu0 %v158
    %288 = vmatprep.subr.mxu0 0.0
    %289 = vmatpush1.msra.mxu0 %v159
    %290 = vmatprep.subr.mxu0 0.0
    %291 = vmatpush1.msra.mxu0 %v160
    %292 = vmatprep.subr.mxu0 0.0
    %293 = vmatpush1.msra.mxu0 %v161
    %294 = vmatprep.subr.mxu0 0.0
    %295 = vmatpush1.msra.mxu0 %v162
    %296 = vmatprep.subr.mxu0 0.0
    %297 = vmatpush1.msra.mxu0 %v163
    %298 = vmatprep.subr.mxu0 0.0
    %299 = vmatpush1.msra.mxu0 %v164
    %300 = vmatprep.subr.mxu0 0.0
    %301 = vmatpush1.msra.mxu0 %v165
    %302 = vmatprep.subr.mxu0 0.0
    %303 = vmatpush1.msra.mxu0 %v166
    %304 = vmatprep.subr.mxu0 0.0
    %305 = vmatpush1.msra.mxu0 %v167
    %306 = vmatprep.subr.mxu0 0.0
    %307 = vmatpush1.msra.mxu0 %v168
    %308 = vmatprep.subr.mxu0 0.0
    %309 = vmatpush1.msra.mxu0 %v169
    %310 = vmatprep.subr.mxu0 0.0
    %311 = vmatpush1.msra.mxu0 %v170
    %312 = vmatprep.subr.mxu0 0.0
    %313 = vmatpush1.msra.mxu0 %v171
    %314 = vmatprep.subr.mxu0 0.0
    %315 = vmatpush1.msra.mxu0 %v172
    %316 = vmatprep.subr.mxu0 0.0
    %317 = vmatpush1.msra.mxu0 %v173
    %318 = vmatprep.subr.mxu0 0.0
    %319 = vmatpush1.msra.mxu0 %v174
    %320 = vmatprep.subr.mxu0 0.0
    %321 = vmatpush1.msra.mxu0 %v175
    %322 = vmatprep.subr.mxu0 0.0
    %323 = vmatpush1.msra.mxu0 %v176
    %324 = vmatprep.subr.mxu0 0.0
    %325 = vmatpush1.msra.mxu0 %v177
    %326 = vmatprep.subr.mxu0 0.0
    %327 = vmatpush1.msra.mxu0 %v178
    %328 = vmatprep.subr.mxu0 0.0
    %329 = vmatpush1.msra.mxu0 %v179
    %330 = vmatprep.subr.mxu0 0.0
    %331 = vmatpush1.msra.mxu0 %v180
    %332 = vmatprep.mubr.f32.mxu0 %v136
    %333 = vmatmul.mubr.f32.gmra.mrb[0].mxu0 %v135
    %v334 = vpop.f32.mrb[0].mxu0
    %v335 = vadd.f32 %v266, %v334
    %v336 = vpop.f32.mrb[0].mxu0
    %337 = vmatprep.mubr.f32.mxu0 %v143
    %338 = vmatmul.mubr.f32.gmra.mrb[0].mxu0 %v142
    %v339 = vpop.f32.mrb[0].mxu0
    %v340 = vadd.f32 %v266, %v339
    %v341 = vpop.f32.mrb[0].mxu0
    %342 = vdwg.mxu0
    %343 = vmatprep.subr.mxu0 0.0
    %344 = vmatpush1.msra.mxu0 %v181
    %345 = vmatprep.subr.mxu0 0.0
    %346 = vmatpush1.msra.mxu0 %v182
    %347 = vmatprep.subr.mxu0 0.0
    %348 = vmatpush1.msra.mxu0 %v183
    %349 = vmatprep.subr.mxu0 0.0
    %350 = vmatpush1.msra.mxu0 %v184
    %351 = vmatprep.subr.mxu0 0.0
    %352 = vmatpush1.msra.mxu0 %v185
    %353 = vmatprep.subr.mxu0 0.0
    %354 = vmatpush1.msra.mxu0 %v186
    %355 = vmatprep.subr.mxu0 0.0
    %356 = vmatpush1.msra.mxu0 %v187
    %357 = vmatprep.subr.mxu0 0.0
    %358 = vmatpush1.msra.mxu0 %v188
    %359 = vmatprep.subr.mxu0 0.0
    %360 = vmatpush1.msra.mxu0 %v189
    %361 = vmatprep.subr.mxu0 0.0
    %362 = vmatpush1.msra.mxu0 %v190
    %363 = vmatprep.subr.mxu0 0.0
    %364 = vmatpush1.msra.mxu0 %v191
    %365 = vmatprep.subr.mxu0 0.0
    %366 = vmatpush1.msra.mxu0 %v192
    %367 = vmatprep.subr.mxu0 0.0
    %368 = vmatpush1.msra.mxu0 %v193
    %369 = vmatprep.subr.mxu0 0.0
    %370 = vmatpush1.msra.mxu0 %v194
    %371 = vmatprep.subr.mxu0 0.0
    %372 = vmatpush1.msra.mxu0 %v195
    %373 = vmatprep.subr.mxu0 0.0
    %374 = vmatpush1.msra.mxu0 %v196
    %375 = vmatprep.subr.mxu0 0.0
    %376 = vmatpush1.msra.mxu0 %v197
    %377 = vmatprep.subr.mxu0 0.0
    %378 = vmatpush1.msra.mxu0 %v198
    %379 = vmatprep.subr.mxu0 0.0
    %380 = vmatpush1.msra.mxu0 %v199
    %381 = vmatprep.subr.mxu0 0.0
    %382 = vmatpush1.msra.mxu0 %v200
    %383 = vmatprep.subr.mxu0 0.0
    %384 = vmatpush1.msra.mxu0 %v201
    %385 = vmatprep.subr.mxu0 0.0
    %386 = vmatpush1.msra.mxu0 %v202
    %387 = vmatprep.subr.mxu0 0.0
    %388 = vmatpush1.msra.mxu0 %v203
    %389 = vmatprep.subr.mxu0 0.0
    %390 = vmatpush1.msra.mxu0 %v204
    %391 = vmatprep.subr.mxu0 0.0
    %392 = vmatpush1.msra.mxu0 %v205
    %393 = vmatprep.subr.mxu0 0.0
    %394 = vmatpush1.msra.mxu0 %v206
    %395 = vmatprep.subr.mxu0 0.0
    %396 = vmatpush1.msra.mxu0 %v207
    %397 = vmatprep.subr.mxu0 0.0
    %398 = vmatpush1.msra.mxu0 %v208
    %399 = vmatprep.subr.mxu0 0.0
    %400 = vmatpush1.msra.mxu0 %v209
    %401 = vmatprep.subr.mxu0 0.0
    %402 = vmatpush1.msra.mxu0 %v210
    %403 = vmatprep.subr.mxu0 0.0
    %404 = vmatpush1.msra.mxu0 %v211
    %405 = vmatprep.subr.mxu0 0.0
    %406 = vmatpush1.msra.mxu0 %v212
    %407 = vmatprep.mubr.f32.mxu0 %v138
    %408 = vmatmul.mubr.f32.gmra.mrb[0].mxu0 %v137
    %v409 = vpop.f32.mrb[0].mxu0
    %v410 = vadd.f32 %v335, %v409
    %v411 = vpop.f32.mrb[0].mxu0
    %412 = vmatprep.mubr.f32.mxu0 %v145
    %413 = vmatmul.mubr.f32.gmra.mrb[0].mxu0 %v144
    %v414 = vpop.f32.mrb[0].mxu0
    %v415 = vadd.f32 %v340, %v414
    %v416 = vpop.f32.mrb[0].mxu0
    %417 = vdwg.mxu0
    %418 = vmatprep.subr.mxu0 0.0
    %419 = vmatpush1.msra.mxu0 %v213
    %420 = vmatprep.subr.mxu0 0.0
    %421 = vmatpush1.msra.mxu0 %v214
    %422 = vmatprep.subr.mxu0 0.0
    %423 = vmatpush1.msra.mxu0 %v215
    %424 = vmatprep.subr.mxu0 0.0
    %425 = vmatpush1.msra.mxu0 %v216
    %426 = vmatprep.subr.mxu0 0.0
    %427 = vmatpush1.msra.mxu0 %v217
    %428 = vmatprep.subr.mxu0 0.0
    %429 = vmatpush1.msra.mxu0 %v218
    %430 = vmatprep.subr.mxu0 0.0
    %431 = vmatpush1.msra.mxu0 %v219
    %432 = vmatprep.subr.mxu0 0.0
    %433 = vmatpush1.msra.mxu0 %v220
    %434 = vmatprep.subr.mxu0 0.0
    %435 = vmatpush1.msra.mxu0 %v221
    %436 = vmatprep.subr.mxu0 0.0
    %437 = vmatpush1.msra.mxu0 %v222
    %438 = vmatprep.subr.mxu0 0.0
    %439 = vmatpush1.msra.mxu0 %v223
    %440 = vmatprep.subr.mxu0 0.0
    %441 = vmatpush1.msra.mxu0 %v224
    %442 = vmatprep.subr.mxu0 0.0
    %443 = vmatpush1.msra.mxu0 %v225
    %444 = vmatprep.subr.mxu0 0.0
    %445 = vmatpush1.msra.mxu0 %v226
    %446 = vmatprep.subr.mxu0 0.0
    %447 = vmatpush1.msra.mxu0 %v227
    %448 = vmatprep.subr.mxu0 0.0
    %449 = vmatpush1.msra.mxu0 %v228
    %450 = vmatprep.subr.mxu0 0.0
    %451 = vmatpush1.msra.mxu0 %v229
    %452 = vmatprep.subr.mxu0 0.0
    %453 = vmatpush1.msra.mxu0 %v230
    %454 = vmatprep.subr.mxu0 0.0
    %455 = vmatpush1.msra.mxu0 %v231
    %456 = vmatprep.subr.mxu0 0.0
    %457 = vmatpush1.msra.mxu0 %v232
    %458 = vmatprep.subr.mxu0 0.0
    %459 = vmatpush1.msra.mxu0 %v233
    %460 = vmatprep.subr.mxu0 0.0
    %461 = vmatpush1.msra.mxu0 %v234
    %462 = vmatprep.subr.mxu0 0.0
    %463 = vmatpush1.msra.mxu0 %v235
    %464 = vmatprep.subr.mxu0 0.0
    %465 = vmatpush1.msra.mxu0 %v236
    %466 = vmatprep.subr.mxu0 0.0
    %467 = vmatpush1.msra.mxu0 %v237
    %468 = vmatprep.subr.mxu0 0.0
    %469 = vmatpush1.msra.mxu0 %v238
    %470 = vmatprep.subr.mxu0 0.0
    %471 = vmatpush1.msra.mxu0 %v239
    %472 = vmatprep.subr.mxu0 0.0
    %473 = vmatpush1.msra.mxu0 %v240
    %474 = vmatprep.subr.mxu0 0.0
    %475 = vmatpush1.msra.mxu0 %v241
    %476 = vmatprep.subr.mxu0 0.0
    %477 = vmatpush1.msra.mxu0 %v242
    %478 = vmatprep.subr.mxu0 0.0
    %479 = vmatpush1.msra.mxu0 %v243
    %480 = vmatprep.subr.mxu0 0.0
    %481 = vmatpush1.msra.mxu0 %v244
    %482 = vmatprep.mubr.f32.mxu0 %v140
    %483 = vmatmul.mubr.f32.gmra.mrb[0].mxu0 %v139
    %v484 = vpop.f32.mrb[0].mxu0
    %v485 = vadd.f32 %v410, %v484
    %v486 = vpop.f32.mrb[0].mxu0
    %487 = vmatprep.mubr.f32.mxu0 %v147
    %488 = vmatmul.mubr.f32.gmra.mrb[0].mxu0 %v146
    %v489 = vpop.f32.mrb[0].mxu0
    %v490 = vadd.f32 %v415, %v489
    %v491 = vpop.f32.mrb[0].mxu0
    %492 = vdwg.mxu0
    %493 = vmatprep.subr.mxu0 0.0
    %494 = vmatpush1.msra.mxu0 %v245
    %495 = vmatprep.subr.mxu0 0.0
    %496 = vmatpush1.msra.mxu0 %v246
    %497 = vmatprep.subr.mxu0 0.0
    %498 = vmatpush1.msra.mxu0 %v247
    %499 = vmatprep.subr.mxu0 0.0
    %500 = vmatpush1.msra.mxu0 %v248
    %501 = vmatprep.subr.mxu0 0.0
    %502 = vmatpush1.msra.mxu0 %v249
    %503 = vmatprep.subr.mxu0 0.0
    %504 = vmatpush1.msra.mxu0 %v250
    %505 = vmatprep.subr.mxu0 0.0
    %506 = vmatpush1.msra.mxu0 %v251
    %507 = vmatprep.subr.mxu0 0.0
    %508 = vmatpush1.msra.mxu0 %v252
    %509 = vmatprep.subr.mxu0 0.0
    %510 = vmatpush1.msra.mxu0 %v253
    %511 = vmatprep.subr.mxu0 0.0
    %512 = vmatpush1.msra.mxu0 %v254
    %513 = vmatprep.subr.mxu0 0.0
    %514 = vmatpush1.msra.mxu0 %v255
    %515 = vmatprep.subr.mxu0 0.0
    %516 = vmatpush1.msra.mxu0 %v256
    %517 = vmatprep.subr.mxu0 0.0
    %518 = vmatpush1.msra.mxu0 %v257
    %519 = vmatprep.subr.mxu0 0.0
    %520 = vmatpush1.msra.mxu0 %v258
    %521 = vmatprep.subr.mxu0 0.0
    %522 = vmatpush1.msra.mxu0 %v259
    %523 = vmatprep.subr.mxu0 0.0
    %524 = vmatpush1.msra.mxu0 %v260
    %525 = vmatprep.subr.mxu0 0.0
    %526 = vmatpush1.msra.mxu0 0.0
    %527 = vmatprep.subr.mxu0 0.0
    %528 = vmatpush1.msra.mxu0 0.0
    %529 = vmatprep.subr.mxu0 0.0
    %530 = vmatpush1.msra.mxu0 0.0
    %531 = vmatprep.subr.mxu0 0.0
    %532 = vmatpush1.msra.mxu0 0.0
    %533 = vmatprep.subr.mxu0 0.0
    %534 = vmatpush1.msra.mxu0 0.0
    %535 = vmatprep.subr.mxu0 0.0
    %536 = vmatpush1.msra.mxu0 0.0
    %537 = vmatprep.subr.mxu0 0.0
    %538 = vmatpush1.msra.mxu0 0.0
    %539 = vmatprep.subr.mxu0 0.0
    %540 = vmatpush1.msra.mxu0 0.0
    %541 = vmatprep.subr.mxu0 0.0
    %542 = vmatpush1.msra.mxu0 0.0
    %543 = vmatprep.subr.mxu0 0.0
    %544 = vmatpush1.msra.mxu0 0.0
    %545 = vmatprep.subr.mxu0 0.0
    %546 = vmatpush1.msra.mxu0 0.0
    %547 = vmatprep.subr.mxu0 0.0
    %548 = vmatpush1.msra.mxu0 0.0
    %549 = vmatprep.subr.mxu0 0.0
    %550 = vmatpush1.msra.mxu0 0.0
    %551 = vmatprep.subr.mxu0 0.0
    %552 = vmatpush1.msra.mxu0 0.0
    %553 = vmatprep.subr.mxu0 0.0
    %554 = vmatpush1.msra.mxu0 0.0
    %555 = vmatprep.subr.mxu0 0.0
    %556 = vmatpush1.msra.mxu0 0.0
    %557 = vmatprep.mubr.f32.mxu0 0.0
    %558 = vmatmul.mubr.f32.gmra.mrb[0].mxu0 %v141
    %v559 = vpop.f32.mrb[0].mxu0
    %v560 = vadd.f32 %v485, %v559
    %v561 = vpop.f32.mrb[0].mxu0
    %562 = vmatprep.mubr.f32.mxu0 0.0
    %563 = vmatmul.mubr.f32.gmra.mrb[0].mxu0 %v148
    %v564 = vpop.f32.mrb[0].mxu0
    %v565 = vadd.f32 %v490, %v564
    %v566 = vpop.f32.mrb[0].mxu0
    %567 = vdwg.mxu0
    %568 = vst [vmem:[#allocation2] sm:$0xff] %v560
    %569 = vst [vmem:[#allocation2 + $0x8] sm:$0xff] %v565
    // Predicated region
    $region18: #{lngap_forward.1} parent=1 // pred_check
      _
    $region19: #{lngap_forward.1} parent=1 // pred_check_branch
      %571 = sbr.rel (0) target = $region21
    $region20: #{lngap_forward.1} parent=1 // pred_region
      %s573 = ssub.s32 256, 256
      %574 = vsyncadd [#allocation3], %s573
      %s575 = sshll.u32 [#allocation2], 4
      %s576 = int_to_ptr.vmem [resolvable:$true] %s575
      %581 = dma.vmem_to_hbm [thread:$0]  %s576, 256, %s4, [#allocation3], 128, 128, 8
    $region21: #{lngap_forward.1} parent=1 // pred_fallthru
      _
    // Predicated region
    $region22: #{lngap_forward.1} parent=1 // pred_check
      _
    $region23: #{lngap_forward.1} parent=1 // pred_check_branch
      %583 = sbr.rel (0) target = $region25
    $region24: #{lngap_forward.1} parent=1 // pred_region
      %584 = dma.done [#allocation3], 256
    $region25: #{lngap_forward.1} parent=1 // pred_fallthru
      _
    %585 = vsyncpa [#allocation3], 1

</llo_original>
